<compile_context>
chip_gen: v5e
topology: v5e:2x2
jax: 0.10.0
libtpu: 0.0.40
codegen_flags: <defaults>
</compile_context>

<pallas_src>
import functools

import jax
import jax.numpy as jnp
from jax.experimental import pallas as pl
from jax.experimental.pallas import tpu as pltpu


# --------------------------------------------------------------------------- #
# Kernel
# --------------------------------------------------------------------------- #
def _qvector_pointer_kernel(x_ref, y_ref, xm_ref, ym_ref, wq_ref, ws_ref,
                            we_ref, ps_ref, pe_ref, *, normalize):
    x = x_ref[...]                       # (tb, Lx, Dx)  compute dtype (bf16)
    y = y_ref[...]                       # (tb, Ly, Dy)
    xm = xm_ref[...].astype(jnp.float32)   # (tb, Lx)  1.0 == masked
    ym = ym_ref[...].astype(jnp.float32)   # (tb, Ly)
    wq = wq_ref[...]                     # (1, Dy)   == w_q.weight
    ws_w = ws_ref[...]                   # (Dy, Dx)  == W_s.weight
    we_w = we_ref[...]                   # (Dy, Dx)  == W_e.weight

    tb, _, dy = y.shape
    neg_inf = jnp.float32(-jnp.inf)

    # --- gamma = softmax_over_Ly(w_q(y)), lane-dense (tb, 1, Ly), f32 -------
    wq_b = jnp.broadcast_to(wq, (tb, 1, dy)).astype(y.dtype)   # hoisted once
    g = jnp.einsum('bkd,bld->bkl', wq_b, y,
                   preferred_element_type=jnp.float32)         # (tb, 1, Ly)
    g = jnp.where(ym[:, None, :] > 0.0, neg_inf, g)            # mask -> -inf
    g = jnp.exp(g - jnp.max(g, axis=-1, keepdims=True))
    # Approximate reciprocal (EUP slot) is fine here: the ~1e-3 relative
    # error only perturbs q/scores; the final pointer softmax is exact.
    g = g * pl.reciprocal(jnp.sum(g, axis=-1, keepdims=True), approx=True)

    # --- q = y^T @ gamma (pooled question vector), gamma kept in f32 --------
    q3 = jnp.einsum('bkl,bld->bkd', g, y.astype(jnp.float32),
                    preferred_element_type=jnp.float32)        # (tb, 1, Dy)
    q2 = q3[:, 0, :].astype(ws_w.dtype)                        # (tb, Dy)

    # Additive mask bias, lane-dense (tb, 1, Lx); -inf matches masked_fill_.
    # NOTE: fully-masked rows yield NaN (exp(-inf - -inf)) exactly as in the
    # PyTorch masked_fill_ + softmax reference -- intentional.
    x_bias = jnp.where(xm[:, None, :] > 0.0, neg_inf,
                       jnp.float32(0.0))                       # (tb, 1, Lx)

    def pointer_head(w):
        # dropout rate == 0 -> (x @ W^T) @ q == x @ (q @ W)  (exact refactor)
        v = jnp.dot(q2, w, preferred_element_type=jnp.float32)   # (tb, Dx)
        s = jnp.einsum('bkd,bld->bkl', v[:, None, :].astype(x.dtype), x,
                       preferred_element_type=jnp.float32)       # (tb, 1, Lx)
        s = s + x_bias
        if normalize:
            p = jnp.exp(s - jnp.max(s, axis=-1, keepdims=True))
            p = p / jnp.sum(p, axis=-1, keepdims=True)           # exact norm
        else:
            p = jax.nn.sigmoid(s)       # sigmoid(-inf) == 0 for masked slots
        return p[:, 0, :]               # (tb, Lx) -- sublane-dense store

    ps_ref[...] = pointer_head(ws_w).astype(ps_ref.dtype)
    pe_ref[...] = pointer_head(we_w).astype(pe_ref.dtype)


# --------------------------------------------------------------------------- #
# Blocking / VMEM budgeting
# --------------------------------------------------------------------------- #
def _round_up(x, m):
    return ((x + m - 1) // m) * m


def _tpu_vmem_info():
    """Returns (physical VMEM bytes per TensorCore, looks-like-2-TC-chip)."""
    cap = 64 * 1024 * 1024             # conservative default (v7x-sized)
    try:
        info = pltpu.get_tpu_info()
        cap = int(getattr(info, "vmem_capacity_bytes", cap))
    except Exception:
        pass
    # Heuristic: 64 MiB/TC VMEM => v7x-class part with 2 TensorCores/chip;
    # v5e / v6e have 128 MiB and a single TensorCore.
    two_tc = cap <= 80 * 1024 * 1024
    return cap, two_tc


def _choose_block_b(B, Lx, Dx, Ly, Dy, cbytes, vmem_budget, two_tc):
    """Largest batch tile whose double-buffered blocks fit the VMEM budget."""
    per_b = (2 * cbytes * (Lx * Dx + Ly * Dy)       # x / y blocks (x2 buffers)
             + 2 * (Lx + Ly)                        # int8 mask blocks (x2)
             + 2 * 2 * 4 * Lx                       # two f32 outputs (x2)
             + 4 * (Ly * Dy + 4 * Lx + 2 * (Dx + Dy)))  # in-kernel f32 temps
    # Weights are constant-indexed but still double-buffered by the pipeline.
    fixed = 2 * cbytes * (2 * Dy * Dx + Dy) + (2 << 20)   # + Mosaic slack
    cap = max(1, (vmem_budget - fixed) // per_b)

    if cap >= B:
        # Whole batch in one step; only split on a 2-TC chip when the batch
        # is large enough for two sublane-aligned halves to be worthwhile.
        if two_tc and B >= 16:
            return _round_up(pl.cdiv(B, 2), 8)
        return B

    # Multi-step: keep (tb, Lx) blocks sublane-aligned (tb % 8 == 0).
    tb = max(8, (cap // 8) * 8)
    if two_tc:
        steps = pl.cdiv(B, tb)
        if steps > 1 and steps % 2:     # even step count for balanced 2 TCs
            tb = max(8, _round_up(pl.cdiv(B, steps + 1), 8))
    return tb


# --------------------------------------------------------------------------- #
# Public wrapper
# --------------------------------------------------------------------------- #
def qvector_pointer(x, y, x_mask, y_mask, wq_weight, ws_weight, we_weight,
                    normalize=True, block_b=None, compute_dtype=jnp.bfloat16):
    """Pallas implementation of QVectorPointer.forward.

    Args:
      x:         (B, Lx, x_size) float
      y:         (B, Ly, y_size) float
      x_mask:    (B, Lx) bool, True == masked
      y_mask:    (B, Ly) bool, True == masked
      wq_weight: (1, y_size)       -- nn.Linear(y_size, 1, bias=False).weight
      ws_weight: (y_size, x_size)  -- nn.Linear(x_size, y_size, bias=False).weight
      we_weight: (y_size, x_size)
    Returns:
      (p_s, p_e), each (B, Lx) float32.
    """
    B, Lx, Dx = x.shape
    _, Ly, Dy = y.shape
    cdtype = jnp.dtype(compute_dtype)
    cbytes = cdtype.itemsize

    vmem_cap, two_tc = _tpu_vmem_info()
    vmem_limit = int(vmem_cap * 0.85)            # compiler scoped-VMEM limit
    tb = block_b if block_b is not None else _choose_block_b(
        B, Lx, Dx, Ly, Dy, cbytes, int(vmem_cap * 0.75), two_tc)

    steps = pl.cdiv(B, tb)
    b_pad = steps * tb

    # Stream activations/weights as bf16 (f32 accumulation inside the kernel).
    xc = jnp.asarray(x).astype(cdtype)
    yc = jnp.asarray(y).astype(cdtype)
    xm = jnp.asarray(x_mask).astype(jnp.int8)    # sublane-dense int8 masks
    ym = jnp.asarray(y_mask).astype(jnp.int8)

    if b_pad != B:
        # Pad the batch instead of collapsing tb; padded rows are unmasked
        # all-zero rows (uniform softmax, no NaNs) and sliced off below.
        pad = b_pad - B
        xc = jnp.pad(xc, ((0, pad), (0, 0), (0, 0)))
        yc = jnp.pad(yc, ((0, pad), (0, 0), (0, 0)))
        xm = jnp.pad(xm, ((0, pad), (0, 0)))
        ym = jnp.pad(ym, ((0, pad), (0, 0)))

    # Weights stay in PyTorch orientation; the refactored kernel consumes
    # W_s.weight / W_e.weight as (Dy, Dx) directly (no transpose needed).
    wq = jnp.asarray(wq_weight).reshape(1, Dy).astype(cdtype)
    ws_w = jnp.asarray(ws_weight).astype(cdtype)
    we_w = jnp.asarray(we_weight).astype(cdtype)

    kernel = functools.partial(_qvector_pointer_kernel, normalize=normalize)

    grid_spec = pltpu.PrefetchScalarGridSpec(
        num_scalar_prefetch=0,
        grid=(steps,),
        in_specs=[
            pl.BlockSpec((tb, Lx, Dx), lambda b: (b, 0, 0)),   # x
            pl.BlockSpec((tb, Ly, Dy), lambda b: (b, 0, 0)),   # y
            pl.BlockSpec((tb, Lx), lambda b: (b, 0)),          # x_mask (int8)
            pl.BlockSpec((tb, Ly), lambda b: (b, 0)),          # y_mask (int8)
            pl.BlockSpec((1, Dy), lambda b: (0, 0)),           # w_q.weight
            pl.BlockSpec((Dy, Dx), lambda b: (0, 0)),          # W_s.weight
            pl.BlockSpec((Dy, Dx), lambda b: (0, 0)),          # W_e.weight
        ],
        out_specs=[
            pl.BlockSpec((tb, Lx), lambda b: (b, 0)),          # p_s
            pl.BlockSpec((tb, Lx), lambda b: (b, 0)),          # p_e
        ],
    )

    p_s, p_e = pl.pallas_call(
        kernel,
        out_shape=(jax.ShapeDtypeStruct((b_pad, Lx), jnp.float32),
                   jax.ShapeDtypeStruct((b_pad, Lx), jnp.float32)),
        grid_spec=grid_spec,
        compiler_params=pltpu.CompilerParams(
            dimension_semantics=("parallel",),       # shard batch over TCs
            vmem_limit_bytes=vmem_limit,             # generation-aware limit
        ),
    )(xc, yc, xm, ym, wq, ws_w, we_w)

    if b_pad != B:
        p_s, p_e = p_s[:B], p_e[:B]
    return p_s, p_e


# --------------------------------------------------------------------------- #
# Pure-JAX reference (mirrors the PyTorch forward)
# --------------------------------------------------------------------------- #
def _reference(x, y, x_mask, y_mask, wq_weight, ws_weight, we_weight,
               normalize=True):
    gamma = jnp.einsum('bld,d->bl', y, wq_weight[0])               # (B, Ly)
    gamma = jnp.where(y_mask, -jnp.inf, gamma)
    gamma = jax.nn.softmax(gamma, axis=-1)
    q = jnp.einsum('bl,bld->bd', gamma, y)                         # (B, Dy)
    xs = jnp.einsum('blx,yx->bly', x, ws_weight)                   # (B, Lx, Dy)
    xe = jnp.einsum('blx,yx->bly', x, we_weight)
    s = jnp.einsum('bly,by->bl', xs, q)
    e = jnp.einsum('bly,by->bl', xe, q)
    s = jnp.where(x_mask, -jnp.inf, s)
    e = jnp.where(x_mask, -jnp.inf, e)
    if normalize:
        return jax.nn.softmax(s, -1), jax.nn.softmax(e, -1)
    return jax.nn.sigmoid(s), jax.nn.sigmoid(e)


if __name__ == "__main__":
    B, Lx, Ly = 4, 16, 8
    x_size, y_size, hidden_size = 32, 48, 32   # hidden_size unused in forward

    key = jax.random.PRNGKey(0)
    kx, ky, kxm, kym, kwq, kws, kwe = jax.random.split(key, 7)

    x = jax.random.normal(kx, (B, Lx, x_size), jnp.float32)
    y = jax.random.normal(ky, (B, Ly, y_size), jnp.float32)
    # Masks: a few masked positions per row, never a fully-masked row.
    x_mask = jax.random.uniform(kxm, (B, Lx)) < 0.25
    x_mask = x_mask.at[:, 0].set(False)
    y_mask = jax.random.uniform(kym, (B, Ly)) < 0.25
    y_mask = y_mask.at[:, 0].set(False)

    # Deterministic synthetic parameters (PyTorch Linear weight shapes).
    wq_weight = jax.random.normal(kwq, (1, y_size), jnp.float32) * 0.1
    ws_weight = jax.random.normal(kws, (y_size, x_size), jnp.float32) * 0.1
    we_weight = jax.random.normal(kwe, (y_size, x_size), jnp.float32) * 0.1

    # Reference computed on the same bf16-rounded values the kernel streams,
    # so the comparison isolates kernel arithmetic (not the bandwidth cast).
    def _bf(a):
        return a.astype(jnp.bfloat16).astype(jnp.float32)
    x_r, y_r = _bf(x), _bf(y)
    wq_r, ws_r, we_r = _bf(wq_weight), _bf(ws_weight), _bf(we_weight)

    # normalize=True (softmax pointers)
    p_s, p_e = qvector_pointer(x, y, x_mask, y_mask,
                               wq_weight, ws_weight, we_weight, normalize=True)
    jax.block_until_ready((p_s, p_e))
    r_s, r_e = _reference(x_r, y_r, x_mask, y_mask, wq_r, ws_r, we_r,
                          normalize=True)
    assert jnp.allclose(p_s, r_s, atol=2e-3, rtol=2e-3)
    assert jnp.allclose(p_e, r_e, atol=2e-3, rtol=2e-3)

    # normalize=False (sigmoid pointers)
    q_s, q_e = qvector_pointer(x, y, x_mask, y_mask,
                               wq_weight, ws_weight, we_weight, normalize=False)
    jax.block_until_ready((q_s, q_e))
    u_s, u_e = _reference(x_r, y_r, x_mask, y_mask, wq_r, ws_r, we_r,
                          normalize=False)
    assert jnp.allclose(q_s, u_s, atol=2e-3, rtol=2e-3)
    assert jnp.allclose(q_e, u_e, atol=2e-3, rtol=2e-3)

    print("KERNEL_OK")
</pallas_src>

<mosaic_0001>
module attributes {stable_mosaic.version = 11 : i64} {
  func.func @_qvector_pointer_kernel(%arg0: i32, %arg1: memref<4x16x32xbf16, #tpu.memory_space<vmem>>, %arg2: memref<4x8x48xbf16, #tpu.memory_space<vmem>>, %arg3: memref<4x16xi8, #tpu.memory_space<vmem>>, %arg4: memref<4x8xi8, #tpu.memory_space<vmem>>, %arg5: memref<1x48xbf16, #tpu.memory_space<vmem>>, %arg6: memref<48x32xbf16, #tpu.memory_space<vmem>>, %arg7: memref<48x32xbf16, #tpu.memory_space<vmem>>, %arg8: memref<4x16xf32, #tpu.memory_space<vmem>>, %arg9: memref<4x16xf32, #tpu.memory_space<vmem>>) attributes {dimension_semantics = [#tpu.dimension_semantics<parallel>], iteration_bounds = array<i64: 1>, scalar_prefetch = 0 : i64, scratch_operands = 0 : i64, tpu.core_type = #tpu.core_type<tc>, window_params = [{transform_indices = @transform_0, window_bounds = array<i64: 4, 16, 32>}, {transform_indices = @transform_1, window_bounds = array<i64: 4, 8, 48>}, {transform_indices = @transform_2, window_bounds = array<i64: 4, 16>}, {transform_indices = @transform_3, window_bounds = array<i64: 4, 8>}, {pipeline_mode = #tpu.pipeline_mode<synchronous>, transform_indices = @transform_4, window_bounds = array<i64: 1, 48>}, {pipeline_mode = #tpu.pipeline_mode<synchronous>, transform_indices = @transform_5, window_bounds = array<i64: 48, 32>}, {pipeline_mode = #tpu.pipeline_mode<synchronous>, transform_indices = @transform_6, window_bounds = array<i64: 48, 32>}, {transform_indices = @transform_7, window_bounds = array<i64: 4, 16>}, {transform_indices = @transform_8, window_bounds = array<i64: 4, 16>}]} {
    %c0 = arith.constant 0 : index
    %c0_0 = arith.constant 0 : index
    %c0_1 = arith.constant 0 : index
    %0 = vector.load %arg1[%c0, %c0_0, %c0_1] : memref<4x16x32xbf16, #tpu.memory_space<vmem>>, vector<4x16x32xbf16>
    %c0_2 = arith.constant 0 : index
    %c0_3 = arith.constant 0 : index
    %c0_4 = arith.constant 0 : index
    %1 = vector.load %arg2[%c0_2, %c0_3, %c0_4] : memref<4x8x48xbf16, #tpu.memory_space<vmem>>, vector<4x8x48xbf16>
    %c0_5 = arith.constant 0 : index
    %c0_6 = arith.constant 0 : index
    %2 = vector.load %arg3[%c0_5, %c0_6] : memref<4x16xi8, #tpu.memory_space<vmem>>, vector<4x16xi8>
    %3 = arith.sitofp %2 : vector<4x16xi8> to vector<4x16xf32>
    %c0_7 = arith.constant 0 : index
    %c0_8 = arith.constant 0 : index
    %4 = vector.load %arg4[%c0_7, %c0_8] : memref<4x8xi8, #tpu.memory_space<vmem>>, vector<4x8xi8>
    %5 = arith.sitofp %4 : vector<4x8xi8> to vector<4x8xf32>
    %c0_9 = arith.constant 0 : index
    %c0_10 = arith.constant 0 : index
    %6 = vector.load %arg5[%c0_9, %c0_10] : memref<1x48xbf16, #tpu.memory_space<vmem>>, vector<1x48xbf16>
    %c0_11 = arith.constant 0 : index
    %c0_12 = arith.constant 0 : index
    %7 = vector.load %arg6[%c0_11, %c0_12] : memref<48x32xbf16, #tpu.memory_space<vmem>>, vector<48x32xbf16>
    %c0_13 = arith.constant 0 : index
    %c0_14 = arith.constant 0 : index
    %8 = vector.load %arg7[%c0_13, %c0_14] : memref<48x32xbf16, #tpu.memory_space<vmem>>, vector<48x32xbf16>
    %9 = vector.shape_cast %6 : vector<1x48xbf16> to vector<1x1x48xbf16>
    %10 = vector.broadcast %9 : vector<1x1x48xbf16> to vector<4x1x48xbf16>
    "tpu.trace_start"() <{level = 10 : i32, message = "bkd,bld->bkl"}> : () -> ()
    %cst = arith.constant dense<0.000000e+00> : vector<4x1x8xf32>
    %11 = tpu.matmul %10, %1, %cst {dimension_numbers = #tpu.dot_dimension_numbers<[2], [2], [1], [1], [0, 0, 0, 1, 1, 1], [0], [0]>} : vector<4x1x48xbf16>, vector<4x8x48xbf16>, vector<4x1x8xf32> -> vector<4x1x8xf32>
    "tpu.trace_stop"() : () -> ()
    %12 = vector.shape_cast %5 : vector<4x8xf32> to vector<4x1x8xf32>
    %cst_15 = arith.constant 0.000000e+00 : f32
    %13 = vector.broadcast %cst_15 : f32 to vector<4x1x8xf32>
    %14 = arith.cmpf ogt, %12, %13 : vector<4x1x8xf32>
    %cst_16 = arith.constant 0xFF800000 : f32
    %15 = vector.broadcast %cst_16 : f32 to vector<4x1x8xf32>
    %16 = arith.select %14, %15, %11 : vector<4x1x8xi1>, vector<4x1x8xf32>
    %cst_17 = arith.constant dense<0xFF800000> : vector<4x1xf32>
    %17 = vector.multi_reduction <maximumf>, %16, %cst_17 [2] : vector<4x1x8xf32> to vector<4x1xf32>
    %18 = vector.shape_cast %17 : vector<4x1xf32> to vector<4x1x1xf32>
    %19 = vector.broadcast %18 : vector<4x1x1xf32> to vector<4x1x8xf32>
    %20 = arith.subf %16, %19 : vector<4x1x8xf32>
    %21 = math.exp %20 : vector<4x1x8xf32>
    %cst_18 = arith.constant dense<0.000000e+00> : vector<4x1xf32>
    %22 = vector.multi_reduction <add>, %21, %cst_18 [2] : vector<4x1x8xf32> to vector<4x1xf32>
    %23 = vector.shape_cast %22 : vector<4x1xf32> to vector<4x1x1xf32>
    %24 = tpu.reciprocal %23 {approx = true} : vector<4x1x1xf32> -> vector<4x1x1xf32>
    %25 = vector.broadcast %24 : vector<4x1x1xf32> to vector<4x1x8xf32>
    %26 = arith.mulf %21, %25 : vector<4x1x8xf32>
    %27 = arith.extf %1 : vector<4x8x48xbf16> to vector<4x8x48xf32>
    "tpu.trace_start"() <{level = 10 : i32, message = "bkl,bld->bkd"}> : () -> ()
    %cst_19 = arith.constant dense<0.000000e+00> : vector<4x1x48xf32>
    %28 = tpu.matmul %26, %27, %cst_19 {dimension_numbers = #tpu.dot_dimension_numbers<[2], [1], [1], [2], [0, 0, 0, 1, 1, 2], [0], [0]>} : vector<4x1x8xf32>, vector<4x8x48xf32>, vector<4x1x48xf32> -> vector<4x1x48xf32>
    "tpu.trace_stop"() : () -> ()
    %29 = vector.shape_cast %28 : vector<4x1x48xf32> to vector<4x48xf32>
    %30 = arith.truncf %29 : vector<4x48xf32> to vector<4x48xbf16>
    %31 = vector.shape_cast %3 : vector<4x16xf32> to vector<4x1x16xf32>
    %cst_20 = arith.constant 0.000000e+00 : f32
    %32 = vector.broadcast %cst_20 : f32 to vector<4x1x16xf32>
    %33 = arith.cmpf ogt, %31, %32 : vector<4x1x16xf32>
    %cst_21 = arith.constant 0xFF800000 : f32
    %cst_22 = arith.constant 0.000000e+00 : f32
    %34 = vector.broadcast %cst_21 : f32 to vector<4x1x16xf32>
    %35 = vector.broadcast %cst_22 : f32 to vector<4x1x16xf32>
    %36 = arith.select %33, %34, %35 : vector<4x1x16xi1>, vector<4x1x16xf32>
    %cst_23 = arith.constant dense<0.000000e+00> : vector<4x32xf32>
    %37 = tpu.matmul %30, %7, %cst_23 {dimension_numbers = #tpu.dot_dimension_numbers<[1], [0], [0], [1], [0, 0, 1, 1], [], []>} : vector<4x48xbf16>, vector<48x32xbf16>, vector<4x32xf32> -> vector<4x32xf32>
    %38 = vector.shape_cast %37 : vector<4x32xf32> to vector<4x1x32xf32>
    %39 = arith.truncf %38 : vector<4x1x32xf32> to vector<4x1x32xbf16>
    "tpu.trace_start"() <{level = 10 : i32, message = "bkd,bld->bkl"}> : () -> ()
    %cst_24 = arith.constant dense<0.000000e+00> : vector<4x1x16xf32>
    %40 = tpu.matmul %39, %0, %cst_24 {dimension_numbers = #tpu.dot_dimension_numbers<[2], [2], [1], [1], [0, 0, 0, 1, 1, 1], [0], [0]>} : vector<4x1x32xbf16>, vector<4x16x32xbf16>, vector<4x1x16xf32> -> vector<4x1x16xf32>
    "tpu.trace_stop"() : () -> ()
    %41 = arith.addf %40, %36 : vector<4x1x16xf32>
    %cst_25 = arith.constant dense<0xFF800000> : vector<4x1xf32>
    %42 = vector.multi_reduction <maximumf>, %41, %cst_25 [2] : vector<4x1x16xf32> to vector<4x1xf32>
    %43 = vector.shape_cast %42 : vector<4x1xf32> to vector<4x1x1xf32>
    %44 = vector.broadcast %43 : vector<4x1x1xf32> to vector<4x1x16xf32>
    %45 = arith.subf %41, %44 : vector<4x1x16xf32>
    %46 = math.exp %45 : vector<4x1x16xf32>
    %cst_26 = arith.constant dense<0.000000e+00> : vector<4x1xf32>
    %47 = vector.multi_reduction <add>, %46, %cst_26 [2] : vector<4x1x16xf32> to vector<4x1xf32>
    %48 = vector.shape_cast %47 : vector<4x1xf32> to vector<4x1x1xf32>
    %49 = vector.broadcast %48 : vector<4x1x1xf32> to vector<4x1x16xf32>
    %50 = arith.divf %46, %49 : vector<4x1x16xf32>
    %51 = vector.shape_cast %50 : vector<4x1x16xf32> to vector<4x16xf32>
    %c0_27 = arith.constant 0 : index
    %c0_28 = arith.constant 0 : index
    %52 = vector.load %arg8[%c0_27, %c0_28] : memref<4x16xf32, #tpu.memory_space<vmem>>, vector<4x16xf32>
    tpu.vector_store %arg8[%c0_27, %c0_28], %51 {strides = array<i32>} : memref<4x16xf32, #tpu.memory_space<vmem>>, vector<4x16xf32>,
    %cst_29 = arith.constant dense<0.000000e+00> : vector<4x32xf32>
    %53 = tpu.matmul %30, %8, %cst_29 {dimension_numbers = #tpu.dot_dimension_numbers<[1], [0], [0], [1], [0, 0, 1, 1], [], []>} : vector<4x48xbf16>, vector<48x32xbf16>, vector<4x32xf32> -> vector<4x32xf32>
    %54 = vector.shape_cast %53 : vector<4x32xf32> to vector<4x1x32xf32>
    %55 = arith.truncf %54 : vector<4x1x32xf32> to vector<4x1x32xbf16>
    "tpu.trace_start"() <{level = 10 : i32, message = "bkd,bld->bkl"}> : () -> ()
    %cst_30 = arith.constant dense<0.000000e+00> : vector<4x1x16xf32>
    %56 = tpu.matmul %55, %0, %cst_30 {dimension_numbers = #tpu.dot_dimension_numbers<[2], [2], [1], [1], [0, 0, 0, 1, 1, 1], [0], [0]>} : vector<4x1x32xbf16>, vector<4x16x32xbf16>, vector<4x1x16xf32> -> vector<4x1x16xf32>
    "tpu.trace_stop"() : () -> ()
    %57 = arith.addf %56, %36 : vector<4x1x16xf32>
    %cst_31 = arith.constant dense<0xFF800000> : vector<4x1xf32>
    %58 = vector.multi_reduction <maximumf>, %57, %cst_31 [2] : vector<4x1x16xf32> to vector<4x1xf32>
    %59 = vector.shape_cast %58 : vector<4x1xf32> to vector<4x1x1xf32>
    %60 = vector.broadcast %59 : vector<4x1x1xf32> to vector<4x1x16xf32>
    %61 = arith.subf %57, %60 : vector<4x1x16xf32>
    %62 = math.exp %61 : vector<4x1x16xf32>
    %cst_32 = arith.constant dense<0.000000e+00> : vector<4x1xf32>
    %63 = vector.multi_reduction <add>, %62, %cst_32 [2] : vector<4x1x16xf32> to vector<4x1xf32>
    %64 = vector.shape_cast %63 : vector<4x1xf32> to vector<4x1x1xf32>
    %65 = vector.broadcast %64 : vector<4x1x1xf32> to vector<4x1x16xf32>
    %66 = arith.divf %62, %65 : vector<4x1x16xf32>
    %67 = vector.shape_cast %66 : vector<4x1x16xf32> to vector<4x16xf32>
    %c0_33 = arith.constant 0 : index
    %c0_34 = arith.constant 0 : index
    %68 = vector.load %arg9[%c0_33, %c0_34] : memref<4x16xf32, #tpu.memory_space<vmem>>, vector<4x16xf32>
    tpu.vector_store %arg9[%c0_33, %c0_34], %67 {strides = array<i32>} : memref<4x16xf32, #tpu.memory_space<vmem>>, vector<4x16xf32>,
    return
  }
  func.func @transform_0(%arg0: i32) -> (i32, i32, i32) {
    %c0_i32 = arith.constant 0 : i32
    %c0_i32_0 = arith.constant 0 : i32
    %c0_i32_1 = arith.constant 0 : i32
    return %arg0, %c0_i32, %c0_i32_0 : i32, i32, i32
  }
  func.func @transform_1(%arg0: i32) -> (i32, i32, i32) {
    %c0_i32 = arith.constant 0 : i32
    %c0_i32_0 = arith.constant 0 : i32
    %c0_i32_1 = arith.constant 0 : i32
    return %arg0, %c0_i32, %c0_i32_0 : i32, i32, i32
  }
  func.func @transform_2(%arg0: i32) -> (i32, i32) {
    %c0_i32 = arith.constant 0 : i32
    %c0_i32_0 = arith.constant 0 : i32
    return %arg0, %c0_i32 : i32, i32
  }
  func.func @transform_3(%arg0: i32) -> (i32, i32) {
    %c0_i32 = arith.constant 0 : i32
    %c0_i32_0 = arith.constant 0 : i32
    return %arg0, %c0_i32 : i32, i32
  }
  func.func @transform_4(%arg0: i32) -> (i32, i32) {
    %c0_i32 = arith.constant 0 : i32
    %c0_i32_0 = arith.constant 0 : i32
    %c0_i32_1 = arith.constant 0 : i32
    return %c0_i32, %c0_i32_0 : i32, i32
  }
  func.func @transform_5(%arg0: i32) -> (i32, i32) {
    %c0_i32 = arith.constant 0 : i32
    %c0_i32_0 = arith.constant 0 : i32
    %c0_i32_1 = arith.constant 0 : i32
    return %c0_i32, %c0_i32_0 : i32, i32
  }
  func.func @transform_6(%arg0: i32) -> (i32, i32) {
    %c0_i32 = arith.constant 0 : i32
    %c0_i32_0 = arith.constant 0 : i32
    %c0_i32_1 = arith.constant 0 : i32
    return %c0_i32, %c0_i32_0 : i32, i32
  }
  func.func @transform_7(%arg0: i32) -> (i32, i32) {
    %c0_i32 = arith.constant 0 : i32
    %c0_i32_0 = arith.constant 0 : i32
    return %arg0, %c0_i32 : i32, i32
  }
  func.func @transform_8(%arg0: i32) -> (i32, i32) {
    %c0_i32 = arith.constant 0 : i32
    %c0_i32_0 = arith.constant 0 : i32
    return %arg0, %c0_i32 : i32, i32
  }
}

</mosaic_0001>

<llo_original>
// kernel: tpu_custom_call.1
$region0: #{tpu_custom_call.1}
  #allocation0 [shape = 'u32[]', space=smem, size = 0x4, offset = 0x4, fixed_abs, tag = 'smem constant byte address 0x4 - core index']
  #allocation1 [shape = 'u32[72,128]{1,0:T(1,128)}', space=vmem, size = 0x9000, scoped, tag = 'internal scratch']
  %s0 = inlined_call_operand.vmem [shape: bf16[4,16,32], index: 0, kind: input, shape index: {}]
  %s1 = inlined_call_operand.vmem [shape: bf16[4,8,48], index: 1, kind: input, shape index: {}]
  %s2 = inlined_call_operand.vmem [shape: s8[4,16], index: 2, kind: input, shape index: {}]
  %s3 = inlined_call_operand.vmem [shape: s8[4,8], index: 3, kind: input, shape index: {}]
  %s4 = inlined_call_operand.vmem [shape: bf16[1,48], index: 4, kind: input, shape index: {}]
  %s5 = inlined_call_operand.vmem [shape: bf16[48,32], index: 5, kind: input, shape index: {}]
  %s6 = inlined_call_operand.vmem [shape: bf16[48,32], index: 6, kind: input, shape index: {}]
  %s7 = inlined_call_operand.hbm [shape: f32[4,16], index: 7, kind: output, shape index: {0}]
  %s8 = inlined_call_operand.hbm [shape: f32[4,16], index: 8, kind: output, shape index: {1}]
  %9 = xla_tuple %s7, %s8
  %s10 = sld [smem:[#allocation0]]
  $region46: #{tpu_custom_call.1} parent=0
    _
  %s12 = ssub.s32 1, %s10
  %s13 = scalar_select 0, %s12, %s10
  $region1: #{tpu_custom_call.1} parent=0
    #allocation2 [shape = 'u8[2048]{0}', space=vmem, size = 0x800, scoped, tag = 'output window, operand 0, single buffered']
    #allocation3 [shape = 's32[1]{0}', space=sflag, size = 0x4, scoped, tag = 'scoped memory for tpu_custom_call.1']
    #allocation4 [shape = 'u8[2048]{0}', space=vmem, size = 0x800, scoped, tag = 'output window, operand 1, single buffered']
    #allocation5 [shape = 's32[1]{0}', space=sflag, size = 0x4, scoped, tag = 'scoped memory for tpu_custom_call.1']
    %14 = vsyncpa [#allocation3], 0
    %15 = vsyncpa [#allocation5], 0
    // Predicated region
    $region2: #{tpu_custom_call.1} parent=1 // pred_check
      _
    $region3: #{tpu_custom_call.1} parent=1 // pred_check_branch
      %17 = sbr.rel (0) target = $region5
    $region4: #{tpu_custom_call.1} parent=1 // pred_region
      _
    $region5: #{tpu_custom_call.1} parent=1 // pred_fallthru
      _
    // Predicated region
    $region6: #{tpu_custom_call.1} parent=1 // pred_check
      _
    $region7: #{tpu_custom_call.1} parent=1 // pred_check_branch
      %19 = sbr.rel (0) target = $region9
    $region8: #{tpu_custom_call.1} parent=1 // pred_region
      _
    $region9: #{tpu_custom_call.1} parent=1 // pred_fallthru
      _
    // Predicated region
    $region10: #{tpu_custom_call.1} parent=1 // pred_check
      _
    $region11: #{tpu_custom_call.1} parent=1 // pred_check_branch
      %21 = sbr.rel (0) target = $region13
    $region12: #{tpu_custom_call.1} parent=1 // pred_region
      _
    $region13: #{tpu_custom_call.1} parent=1 // pred_fallthru
      _
    // Predicated region
    $region14: #{tpu_custom_call.1} parent=1 // pred_check
      _
    $region15: #{tpu_custom_call.1} parent=1 // pred_check_branch
      %23 = sbr.rel (0) target = $region17
    $region16: #{tpu_custom_call.1} parent=1 // pred_region
      _
    $region17: #{tpu_custom_call.1} parent=1 // pred_fallthru
      _
    // Predicated region
    $region18: #{tpu_custom_call.1} parent=1 // pred_check
      _
    $region19: #{tpu_custom_call.1} parent=1 // pred_check_branch
      %25 = sbr.rel (0) target = $region21
    $region20: #{tpu_custom_call.1} parent=1 // pred_region
      _
    $region21: #{tpu_custom_call.1} parent=1 // pred_fallthru
      _
    // Predicated region
    $region22: #{tpu_custom_call.1} parent=1 // pred_check
      _
    $region23: #{tpu_custom_call.1} parent=1 // pred_check_branch
      %27 = sbr.rel (0) target = $region25
    $region24: #{tpu_custom_call.1} parent=1 // pred_region
      _
    $region25: #{tpu_custom_call.1} parent=1 // pred_fallthru
      _
    // Predicated region
    $region26: #{tpu_custom_call.1} parent=1 // pred_check
      _
    $region27: #{tpu_custom_call.1} parent=1 // pred_check_branch
      %29 = sbr.rel (0) target = $region29
    $region28: #{tpu_custom_call.1} parent=1 // pred_region
      _
    $region29: #{tpu_custom_call.1} parent=1 // pred_fallthru
      _
    %v31 = vld [vmem:[%s0] sm:$0xf]
    %v32 = vld [vmem:[%s0 + $0x4] sm:$0xf]
    %v33 = vld [vmem:[%s0 + $0x8] sm:$0xf]
    %v34 = vld [vmem:[%s0 + $0xc] sm:$0xf]
    %v35 = vld [vmem:[%s0 + $0x10] sm:$0xf]
    %v36 = vld [vmem:[%s0 + $0x14] sm:$0xf]
    %v37 = vld [vmem:[%s0 + $0x18] sm:$0xf]
    %v38 = vld [vmem:[%s0 + $0x1c] sm:$0xf]
    %v39 = vld [vmem:[%s1] sm:$0xf]
    %v40 = vld [vmem:[%s1 + $0x4] sm:$0xf]
    %v41 = vld [vmem:[%s1 + $0x8] sm:$0xf]
    %v42 = vld [vmem:[%s1 + $0xc] sm:$0xf]
    %v43 = vld [vmem:[%s2] sm:$0x1]
    %v44 = vunpack.c.0.s8 %v43
    %v45 = vcvt.s32.f32 %v44
    %v46 = vld [vmem:[%s3] sm:$0x1]
    %v47 = vunpack.c.0.s8 %v46
    %v48 = vcvt.s32.f32 %v47
    %v49 = vld [vmem:[%s4] sm:$0x1]
    %v50 = vld [vmem:[%s5] sm:$0xf]
    %v51 = vld [vmem:[%s5 + $0x4] sm:$0xf]
    %v52 = vld [vmem:[%s5 + $0x8] sm:$0xf]
    %v53 = vld [vmem:[%s5 + $0xc] sm:$0xf]
    %v54 = vld [vmem:[%s5 + $0x10] sm:$0xf]
    %v55 = vld [vmem:[%s5 + $0x14] sm:$0xf]
    %v56 = vld [vmem:[%s6] sm:$0xf]
    %v57 = vld [vmem:[%s6 + $0x4] sm:$0xf]
    %v58 = vld [vmem:[%s6 + $0x8] sm:$0xf]
    %v59 = vld [vmem:[%s6 + $0xc] sm:$0xf]
    %v60 = vld [vmem:[%s6 + $0x10] sm:$0xf]
    %v61 = vld [vmem:[%s6 + $0x14] sm:$0xf]
    %vm62 = vcmask 392192
    %v64 = vsel %vm62, %v49, 0
    %v67 = vsel %vm62, %v39, 0
    %69 = vmatpush.bf16.xpose.msra.mxu0 0
    %70 = vmatpush.bf16.xpose.msra.mxu0 0
    %71 = vmatpush.bf16.xpose.msra.mxu0 0
    %72 = vmatpush.bf16.xpose.msra.mxu0 0
    %73 = vmatpush.bf16.xpose.msra.mxu0 0
    %74 = vmatpush.bf16.xpose.msra.mxu0 0
    %75 = vmatpush.bf16.xpose.msra.mxu0 0
    %76 = vmatpush.bf16.xpose.msra.mxu0 %v67
    %77 = vmatmul.bf16.gmra.mxu0 %v64
    %v78 = vpop.f32.mrf.mxu0
    %v79 = vadd.f32 0.0, %v78
    %v80 = vpop.f32.mrf.mxu0
    %81 = vdwg.mxu0
    %v83 = vsel %vm62, %v40, 0
    %85 = vmatpush.bf16.xpose.msra.mxu0 0
    %86 = vmatpush.bf16.xpose.msra.mxu0 0
    %87 = vmatpush.bf16.xpose.msra.mxu0 0
    %88 = vmatpush.bf16.xpose.msra.mxu0 0
    %89 = vmatpush.bf16.xpose.msra.mxu0 0
    %90 = vmatpush.bf16.xpose.msra.mxu0 0
    %91 = vmatpush.bf16.xpose.msra.mxu0 0
    %92 = vmatpush.bf16.xpose.msra.mxu0 %v83
    %93 = vmatmul.bf16.gmra.mxu0 %v64
    %v94 = vpop.f32.mrf.mxu0
    %v95 = vadd.f32 0.0, %v94
    %v96 = vpop.f32.mrf.mxu0
    %97 = vdwg.mxu0
    %v99 = vsel %vm62, %v41, 0
    %101 = vmatpush.bf16.xpose.msra.mxu0 0
    %102 = vmatpush.bf16.xpose.msra.mxu0 0
    %103 = vmatpush.bf16.xpose.msra.mxu0 0
    %104 = vmatpush.bf16.xpose.msra.mxu0 0
    %105 = vmatpush.bf16.xpose.msra.mxu0 0
    %106 = vmatpush.bf16.xpose.msra.mxu0 0
    %107 = vmatpush.bf16.xpose.msra.mxu0 0
    %108 = vmatpush.bf16.xpose.msra.mxu0 %v99
    %109 = vmatmul.bf16.gmra.mxu0 %v64
    %v110 = vpop.f32.mrf.mxu0
    %v111 = vadd.f32 0.0, %v110
    %v112 = vpop.f32.mrf.mxu0
    %113 = vdwg.mxu0
    %v115 = vsel %vm62, %v42, 0
    %117 = vmatpush.bf16.xpose.msra.mxu0 0
    %118 = vmatpush.bf16.xpose.msra.mxu0 0
    %119 = vmatpush.bf16.xpose.msra.mxu0 0
    %120 = vmatpush.bf16.xpose.msra.mxu0 0
    %121 = vmatpush.bf16.xpose.msra.mxu0 0
    %122 = vmatpush.bf16.xpose.msra.mxu0 0
    %123 = vmatpush.bf16.xpose.msra.mxu0 0
    %124 = vmatpush.bf16.xpose.msra.mxu0 %v115
    %125 = vmatmul.bf16.gmra.mxu0 %v64
    %v126 = vpop.f32.mrf.mxu0
    %v127 = vadd.f32 0.0, %v126
    %v128 = vpop.f32.mrf.mxu0
    %129 = vdwg.mxu0
    %v131 = vrot.slane %v48, 3
    %vm132 = vcmask 1040384
    %v133 = vsel %vm132, %v48, %v131
    %vm134 = vcmask 1041409
    %v135 = vsel %vm134, %v48, %v131
    %v136 = vrot.slane %v135, 1
    %vm137 = vcmask 1042434
    %v138 = vsel %vm137, %v48, %v131
    %v139 = vrot.slane %v138, 2
    %vm140 = vcmask 1043459
    %v141 = vsel %vm140, %v48, %v131
    %v142 = vrot.slane %v141, 3
    %vm147 = vcmp.gt.f32.partialorder %v133, 0.0
    %vm148 = vcmp.gt.f32.partialorder %v136, 0.0
    %vm149 = vcmp.gt.f32.partialorder %v139, 0.0
    %vm150 = vcmp.gt.f32.partialorder %v142, 0.0
    %v151 = vsel %vm147, -inf, %v79
    %v152 = vsel %vm148, -inf, %v95
    %v153 = vsel %vm149, -inf, %v111
    %v154 = vsel %vm150, -inf, %v127
    %vm155 = vcmask 57344
    %v156 = vsel %vm155, %v151, -inf
    %157 = vmax.xlane.f32.xlu0 %v156
    %v158 = vpop.xlane.xlu0 %157
    %v159 = vsel %vm155, %v152, -inf
    %160 = vmax.xlane.f32.xlu0 %v159
    %v161 = vpop.xlane.xlu0 %160
    %v162 = vsel %vm155, %v153, -inf
    %163 = vmax.xlane.f32.xlu0 %v162
    %v164 = vpop.xlane.xlu0 %163
    %v165 = vsel %vm155, %v154, -inf
    %166 = vmax.xlane.f32.xlu0 %v165
    %v167 = vpop.xlane.xlu0 %166
    %v168 = vsub.f32 %v151, %v158
    %v169 = vsub.f32 %v152, %v161
    %v170 = vsub.f32 %v153, %v164
    %v171 = vsub.f32 %v154, %v167
    %v172 = vmul.f32 %v168, 1.442695
    %v173 = vpow.pop %v172
    %v174 = vmul.f32 %v169, 1.442695
    %v175 = vpow.pop %v174
    %v176 = vmul.f32 %v170, 1.442695
    %v177 = vpow.pop %v176
    %v178 = vmul.f32 %v171, 1.442695
    %v179 = vpow.pop %v178
    %v180 = vsel %vm155, %v173, 0.0
    %181 = vadd.xlane.f32.xlu0 %v180
    %v182 = vpop.xlane.xlu0 %181
    %v183 = vsel %vm155, %v175, 0.0
    %184 = vadd.xlane.f32.xlu0 %v183
    %v185 = vpop.xlane.xlu0 %184
    %v186 = vsel %vm155, %v177, 0.0
    %187 = vadd.xlane.f32.xlu0 %v186
    %v188 = vpop.xlane.xlu0 %187
    %v189 = vsel %vm155, %v179, 0.0
    %190 = vadd.xlane.f32.xlu0 %v189
    %v191 = vpop.xlane.xlu0 %190
    %v192 = vrcp.pop %v182
    %v193 = vrcp.pop %v185
    %v194 = vrcp.pop %v188
    %v195 = vrcp.pop %v191
    %v196 = vmul.f32 %v173, %v192
    %v197 = vmul.f32 %v175, %v193
    %v198 = vmul.f32 %v177, %v194
    %v199 = vmul.f32 %v179, %v195
    %v200 = vunpack.c.l.bf16 %v39
    %v201 = vunpack.c.l.bf16 %v40
    %v202 = vunpack.c.l.bf16 %v41
    %v203 = vunpack.c.l.bf16 %v42
    %vm204 = vcmask 64512
    %v206 = vsel %vm204, %v196, 0
    %208 = vmatpush.msra.mxu0 0.0
    %209 = vmatpush.msra.mxu0 0.0
    %210 = vmatpush.msra.mxu0 0.0
    %211 = vmatpush.msra.mxu0 0.0
    %212 = vmatpush.msra.mxu0 0.0
    %213 = vmatpush.msra.mxu0 0.0
    %214 = vmatpush.msra.mxu0 0.0
    %215 = vmatpush.msra.mxu0 0.0
    %216 = vmatpush.msra.mxu0 0.0
    %217 = vmatpush.msra.mxu0 0.0
    %218 = vmatpush.msra.mxu0 0.0
    %219 = vmatpush.msra.mxu0 0.0
    %220 = vmatpush.msra.mxu0 0.0
    %221 = vmatpush.msra.mxu0 0.0
    %222 = vmatpush.msra.mxu0 0.0
    %223 = vmatpush.msra.mxu0 %v200
    %224 = vmatmul.f32.gmra.mxu0 %v206
    %v225 = vpop.f32.mrf.mxu0
    %v226 = vadd.f32 0.0, %v225
    %227 = vdwg.mxu0
    %v229 = vsel %vm204, %v197, 0
    %231 = vmatpush.msra.mxu0 0.0
    %232 = vmatpush.msra.mxu0 0.0
    %233 = vmatpush.msra.mxu0 0.0
    %234 = vmatpush.msra.mxu0 0.0
    %235 = vmatpush.msra.mxu0 0.0
    %236 = vmatpush.msra.mxu0 0.0
    %237 = vmatpush.msra.mxu0 0.0
    %238 = vmatpush.msra.mxu0 0.0
    %239 = vmatpush.msra.mxu0 0.0
    %240 = vmatpush.msra.mxu0 0.0
    %241 = vmatpush.msra.mxu0 0.0
    %242 = vmatpush.msra.mxu0 0.0
    %243 = vmatpush.msra.mxu0 0.0
    %244 = vmatpush.msra.mxu0 0.0
    %245 = vmatpush.msra.mxu0 0.0
    %246 = vmatpush.msra.mxu0 %v201
    %247 = vmatmul.f32.gmra.mxu0 %v229
    %v248 = vpop.f32.mrf.mxu0
    %v249 = vadd.f32 0.0, %v248
    %250 = vdwg.mxu0
    %v252 = vsel %vm204, %v198, 0
    %254 = vmatpush.msra.mxu0 0.0
    %255 = vmatpush.msra.mxu0 0.0
    %256 = vmatpush.msra.mxu0 0.0
    %257 = vmatpush.msra.mxu0 0.0
    %258 = vmatpush.msra.mxu0 0.0
    %259 = vmatpush.msra.mxu0 0.0
    %260 = vmatpush.msra.mxu0 0.0
    %261 = vmatpush.msra.mxu0 0.0
    %262 = vmatpush.msra.mxu0 0.0
    %263 = vmatpush.msra.mxu0 0.0
    %264 = vmatpush.msra.mxu0 0.0
    %265 = vmatpush.msra.mxu0 0.0
    %266 = vmatpush.msra.mxu0 0.0
    %267 = vmatpush.msra.mxu0 0.0
    %268 = vmatpush.msra.mxu0 0.0
    %269 = vmatpush.msra.mxu0 %v202
    %270 = vmatmul.f32.gmra.mxu0 %v252
    %v271 = vpop.f32.mrf.mxu0
    %v272 = vadd.f32 0.0, %v271
    %273 = vdwg.mxu0
    %v275 = vsel %vm204, %v199, 0
    %277 = vmatpush.msra.mxu0 0.0
    %278 = vmatpush.msra.mxu0 0.0
    %279 = vmatpush.msra.mxu0 0.0
    %280 = vmatpush.msra.mxu0 0.0
    %281 = vmatpush.msra.mxu0 0.0
    %282 = vmatpush.msra.mxu0 0.0
    %283 = vmatpush.msra.mxu0 0.0
    %284 = vmatpush.msra.mxu0 0.0
    %285 = vmatpush.msra.mxu0 0.0
    %286 = vmatpush.msra.mxu0 0.0
    %287 = vmatpush.msra.mxu0 0.0
    %288 = vmatpush.msra.mxu0 0.0
    %289 = vmatpush.msra.mxu0 0.0
    %290 = vmatpush.msra.mxu0 0.0
    %291 = vmatpush.msra.mxu0 0.0
    %292 = vmatpush.msra.mxu0 %v203
    %293 = vmatmul.f32.gmra.mxu0 %v275
    %v294 = vpop.f32.mrf.mxu0
    %v295 = vadd.f32 0.0, %v294
    %296 = vdwg.mxu0
    %v297 = vpack.c.bf16 %v226, %v226
    %v298 = vpack.c.bf16 %v249, %v249
    %v299 = vpack.c.bf16 %v272, %v272
    %v300 = vpack.c.bf16 %v295, %v295
    %v302 = vrot.slane %v45, 3
    %v303 = vsel %vm132, %v45, %v302
    %v304 = vsel %vm134, %v45, %v302
    %v305 = vrot.slane %v304, 1
    %v306 = vsel %vm137, %v45, %v302
    %v307 = vrot.slane %v306, 2
    %v308 = vsel %vm140, %v45, %v302
    %v309 = vrot.slane %v308, 3
    %vm314 = vcmp.gt.f32.partialorder %v303, 0.0
    %vm315 = vcmp.gt.f32.partialorder %v305, 0.0
    %vm316 = vcmp.gt.f32.partialorder %v307, 0.0
    %vm317 = vcmp.gt.f32.partialorder %v309, 0.0
    %v318 = vsel %vm314, -inf, 0.0
    %v319 = vsel %vm315, -inf, 0.0
    %v320 = vsel %vm316, -inf, 0.0
    %v321 = vsel %vm317, -inf, 0.0
    %v326 = vunpack.c.l.b16 %v297
    %v327 = vunpack.c.l.b16 %v298
    %v328 = vunpack.c.l.b16 %v299
    %v329 = vunpack.c.l.b16 %v300
    %v330 = vrot.slane %v327, 7
    %v331 = vsel %vm134, %v330, %v326
    %v332 = vrot.slane %v328, 6
    %v333 = vsel %vm137, %v332, %v331
    %v334 = vrot.slane %v329, 5
    %v335 = vsel %vm140, %v334, %v333
    %v336 = vpack.c.b16 %v335, %v335
    %v343 = vunpack.c.l.b16 %v50
    %v344 = vunpack.c.l.b16 %v51
    %v345 = vunpack.c.l.b16 %v52
    %v346 = vunpack.c.l.b16 %v53
    %v347 = vunpack.c.l.b16 %v54
    %v348 = vunpack.c.l.b16 %v55
    %v349 = vpack.c.b16 %v344, %v343
    %v350 = vpack.c.b16 %v346, %v345
    %v351 = vpack.c.b16 %v348, %v347
    %v356 = vsel %vm62, %v336, 0
    %358 = vmatpush.bf16.msra.mxu0 0
    %359 = vmatpush.bf16.msra.mxu0 0
    %360 = vmatpush.bf16.msra.mxu0 0
    %361 = vmatpush.bf16.msra.mxu0 0
    %362 = vmatpush.bf16.msra.mxu0 0
    %363 = vmatpush.bf16.msra.mxu0 %v351
    %364 = vmatpush.bf16.msra.mxu0 %v350
    %365 = vmatpush.bf16.msra.mxu0 %v349
    %366 = vmatmul.bf16.gmra.mxu0 %v356
    %v367 = vpop.f32.mrf.mxu0
    %v368 = vadd.f32 0.0, %v367
    %v369 = vpop.f32.mrf.mxu0
    %370 = vdwg.mxu0
    %v372 = vrot.slane %v368, 1
    %v373 = vrot.slane %v368, 2
    %v374 = vrot.slane %v368, 3
    %v378 = vpack.c.bf16 %v368, %v368
    %v379 = vpack.c.bf16 %v372, %v372
    %v380 = vpack.c.bf16 %v373, %v373
    %v381 = vpack.c.bf16 %v374, %v374
    %v384 = vunpack.c.l.b16 %v31
    %v385 = vunpack.c.l.b16 %v32
    %v386 = vpack.c.b16 %v385, %v384
    %vm387 = vcmask 261120
    %v389 = vsel %vm387, %v378, 0
    %v392 = vsel %vm387, %v386, 0
    %394 = vmatpush.bf16.xpose.msra.mxu0 0
    %395 = vmatpush.bf16.xpose.msra.mxu0 0
    %396 = vmatpush.bf16.xpose.msra.mxu0 0
    %397 = vmatpush.bf16.xpose.msra.mxu0 0
    %398 = vmatpush.bf16.xpose.msra.mxu0 0
    %399 = vmatpush.bf16.xpose.msra.mxu0 0
    %400 = vmatpush.bf16.xpose.msra.mxu0 0
    %401 = vmatpush.bf16.xpose.msra.mxu0 %v392
    %402 = vmatmul.bf16.gmra.mxu0 %v389
    %v403 = vpop.f32.mrf.mxu0
    %v404 = vadd.f32 %v318, %v403
    %v405 = vpop.f32.mrf.mxu0
    %406 = vdwg.mxu0
    %v409 = vunpack.c.l.b16 %v33
    %v410 = vunpack.c.l.b16 %v34
    %v411 = vpack.c.b16 %v410, %v409
    %v413 = vsel %vm387, %v379, 0
    %v416 = vsel %vm387, %v411, 0
    %418 = vmatpush.bf16.xpose.msra.mxu0 0
    %419 = vmatpush.bf16.xpose.msra.mxu0 0
    %420 = vmatpush.bf16.xpose.msra.mxu0 0
    %421 = vmatpush.bf16.xpose.msra.mxu0 0
    %422 = vmatpush.bf16.xpose.msra.mxu0 0
    %423 = vmatpush.bf16.xpose.msra.mxu0 0
    %424 = vmatpush.bf16.xpose.msra.mxu0 0
    %425 = vmatpush.bf16.xpose.msra.mxu0 %v416
    %426 = vmatmul.bf16.gmra.mxu0 %v413
    %v427 = vpop.f32.mrf.mxu0
    %v428 = vadd.f32 %v319, %v427
    %v429 = vpop.f32.mrf.mxu0
    %430 = vdwg.mxu0
    %v433 = vunpack.c.l.b16 %v35
    %v434 = vunpack.c.l.b16 %v36
    %v435 = vpack.c.b16 %v434, %v433
    %v437 = vsel %vm387, %v380, 0
    %v440 = vsel %vm387, %v435, 0
    %442 = vmatpush.bf16.xpose.msra.mxu0 0
    %443 = vmatpush.bf16.xpose.msra.mxu0 0
    %444 = vmatpush.bf16.xpose.msra.mxu0 0
    %445 = vmatpush.bf16.xpose.msra.mxu0 0
    %446 = vmatpush.bf16.xpose.msra.mxu0 0
    %447 = vmatpush.bf16.xpose.msra.mxu0 0
    %448 = vmatpush.bf16.xpose.msra.mxu0 0
    %449 = vmatpush.bf16.xpose.msra.mxu0 %v440
    %450 = vmatmul.bf16.gmra.mxu0 %v437
    %v451 = vpop.f32.mrf.mxu0
    %v452 = vadd.f32 %v320, %v451
    %v453 = vpop.f32.mrf.mxu0
    %454 = vdwg.mxu0
    %v457 = vunpack.c.l.b16 %v37
    %v458 = vunpack.c.l.b16 %v38
    %v459 = vpack.c.b16 %v458, %v457
    %v461 = vsel %vm387, %v381, 0
    %v464 = vsel %vm387, %v459, 0
    %466 = vmatpush.bf16.xpose.msra.mxu0 0
    %467 = vmatpush.bf16.xpose.msra.mxu0 0
    %468 = vmatpush.bf16.xpose.msra.mxu0 0
    %469 = vmatpush.bf16.xpose.msra.mxu0 0
    %470 = vmatpush.bf16.xpose.msra.mxu0 0
    %471 = vmatpush.bf16.xpose.msra.mxu0 0
    %472 = vmatpush.bf16.xpose.msra.mxu0 0
    %473 = vmatpush.bf16.xpose.msra.mxu0 %v464
    %474 = vmatmul.bf16.gmra.mxu0 %v461
    %v475 = vpop.f32.mrf.mxu0
    %v476 = vadd.f32 %v321, %v475
    %v477 = vpop.f32.mrf.mxu0
    %478 = vdwg.mxu0
    %vm479 = vcmask 122880
    %v480 = vsel %vm479, %v404, -inf
    %481 = vmax.xlane.f32.xlu0 %v480
    %v482 = vpop.xlane.xlu0 %481
    %v483 = vsel %vm479, %v428, -inf
    %484 = vmax.xlane.f32.xlu0 %v483
    %v485 = vpop.xlane.xlu0 %484
    %v486 = vsel %vm479, %v452, -inf
    %487 = vmax.xlane.f32.xlu0 %v486
    %v488 = vpop.xlane.xlu0 %487
    %v489 = vsel %vm479, %v476, -inf
    %490 = vmax.xlane.f32.xlu0 %v489
    %v491 = vpop.xlane.xlu0 %490
    %v492 = vsub.f32 %v404, %v482
    %v493 = vsub.f32 %v428, %v485
    %v494 = vsub.f32 %v452, %v488
    %v495 = vsub.f32 %v476, %v491
    %v496 = vmul.f32 %v492, 1.442695
    %v497 = vpow.pop %v496
    %v498 = vmul.f32 %v493, 1.442695
    %v499 = vpow.pop %v498
    %v500 = vmul.f32 %v494, 1.442695
    %v501 = vpow.pop %v500
    %v502 = vmul.f32 %v495, 1.442695
    %v503 = vpow.pop %v502
    %v504 = vsel %vm479, %v497, 0.0
    %505 = vadd.xlane.f32.xlu0 %v504
    %v506 = vpop.xlane.xlu0 %505
    %v507 = vsel %vm479, %v499, 0.0
    %508 = vadd.xlane.f32.xlu0 %v507
    %v509 = vpop.xlane.xlu0 %508
    %v510 = vsel %vm479, %v501, 0.0
    %511 = vadd.xlane.f32.xlu0 %v510
    %v512 = vpop.xlane.xlu0 %511
    %v513 = vsel %vm479, %v503, 0.0
    %514 = vadd.xlane.f32.xlu0 %v513
    %v515 = vpop.xlane.xlu0 %514
    %v516 = vrcp.pop %v506
    %v517 = vmul.f32 %v506, %v516
    %v518 = vsub.f32 1.0, %v517
    %v519 = vmul.f32 %v516, %v518
    %v520 = vadd.f32 %v516, %v519
    %vm521 = vweird.f32 %v506
    %vm522 = vweird.f32 %v516
    %vm523 = vmor %vm521, %vm522
    %v524 = vsel %vm523, %v516, %v520
    %v525 = vand.u32 2147483647, %v506
    %vm526 = vcmp.eq.f32.partialorder %v525, 8.507059e+37
    %v527 = vand.u32 %v506, 2147483648
    %v528 = vor.u32 1.1754944e-38, %v527
    %v529 = vsel %vm526, %v528, %v524
    %v530 = vmul.f32 %v497, %v529
    %v531 = vrcp.pop %v509
    %v532 = vmul.f32 %v509, %v531
    %v533 = vsub.f32 1.0, %v532
    %v534 = vmul.f32 %v531, %v533
    %v535 = vadd.f32 %v531, %v534
    %vm536 = vweird.f32 %v509
    %vm537 = vweird.f32 %v531
    %vm538 = vmor %vm536, %vm537
    %v539 = vsel %vm538, %v531, %v535
    %v540 = vand.u32 2147483647, %v509
    %vm541 = vcmp.eq.f32.partialorder %v540, 8.507059e+37
    %v542 = vand.u32 %v509, 2147483648
    %v543 = vor.u32 1.1754944e-38, %v542
    %v544 = vsel %vm541, %v543, %v539
    %v545 = vmul.f32 %v499, %v544
    %v546 = vrcp.pop %v512
    %v547 = vmul.f32 %v512, %v546
    %v548 = vsub.f32 1.0, %v547
    %v549 = vmul.f32 %v546, %v548
    %v550 = vadd.f32 %v546, %v549
    %vm551 = vweird.f32 %v512
    %vm552 = vweird.f32 %v546
    %vm553 = vmor %vm551, %vm552
    %v554 = vsel %vm553, %v546, %v550
    %v555 = vand.u32 2147483647, %v512
    %vm556 = vcmp.eq.f32.partialorder %v555, 8.507059e+37
    %v557 = vand.u32 %v512, 2147483648
    %v558 = vor.u32 1.1754944e-38, %v557
    %v559 = vsel %vm556, %v558, %v554
    %v560 = vmul.f32 %v501, %v559
    %v561 = vrcp.pop %v515
    %v562 = vmul.f32 %v515, %v561
    %v563 = vsub.f32 1.0, %v562
    %v564 = vmul.f32 %v561, %v563
    %v565 = vadd.f32 %v561, %v564
    %vm566 = vweird.f32 %v515
    %vm567 = vweird.f32 %v561
    %vm568 = vmor %vm566, %vm567
    %v569 = vsel %vm568, %v561, %v565
    %v570 = vand.u32 2147483647, %v515
    %vm571 = vcmp.eq.f32.partialorder %v570, 8.507059e+37
    %v572 = vand.u32 %v515, 2147483648
    %v573 = vor.u32 1.1754944e-38, %v572
    %v574 = vsel %vm571, %v573, %v569
    %v575 = vmul.f32 %v503, %v574
    %v580 = vrot.slane %v545, 7
    %v581 = vsel %vm134, %v580, %v530
    %v582 = vrot.slane %v560, 6
    %v583 = vsel %vm137, %v582, %v581
    %v584 = vrot.slane %v575, 5
    %v585 = vsel %vm140, %v584, %v583
    %vm587 = vcmask 125952
    %588 = vst.msk [vmem:[#allocation2] sm:$0xf] %vm587, %v585
    %v595 = vunpack.c.l.b16 %v56
    %v596 = vunpack.c.l.b16 %v57
    %v597 = vunpack.c.l.b16 %v58
    %v598 = vunpack.c.l.b16 %v59
    %v599 = vunpack.c.l.b16 %v60
    %v600 = vunpack.c.l.b16 %v61
    %v601 = vpack.c.b16 %v596, %v595
    %v602 = vpack.c.b16 %v598, %v597
    %v603 = vpack.c.b16 %v600, %v599
    %607 = vmatpush.bf16.msra.mxu0 0
    %608 = vmatpush.bf16.msra.mxu0 0
    %609 = vmatpush.bf16.msra.mxu0 0
    %610 = vmatpush.bf16.msra.mxu0 0
    %611 = vmatpush.bf16.msra.mxu0 0
    %612 = vmatpush.bf16.msra.mxu0 %v603
    %613 = vmatpush.bf16.msra.mxu0 %v602
    %614 = vmatpush.bf16.msra.mxu0 %v601
    %615 = vmatmul.bf16.gmra.mxu0 %v356
    %v616 = vpop.f32.mrf.mxu0
    %v617 = vadd.f32 0.0, %v616
    %v618 = vpop.f32.mrf.mxu0
    %619 = vdwg.mxu0
    %v621 = vrot.slane %v617, 1
    %v622 = vrot.slane %v617, 2
    %v623 = vrot.slane %v617, 3
    %v627 = vpack.c.bf16 %v617, %v617
    %v628 = vpack.c.bf16 %v621, %v621
    %v629 = vpack.c.bf16 %v622, %v622
    %v630 = vpack.c.bf16 %v623, %v623
    %v632 = vsel %vm387, %v627, 0
    %634 = vmatpush.bf16.xpose.msra.mxu0 0
    %635 = vmatpush.bf16.xpose.msra.mxu0 0
    %636 = vmatpush.bf16.xpose.msra.mxu0 0
    %637 = vmatpush.bf16.xpose.msra.mxu0 0
    %638 = vmatpush.bf16.xpose.msra.mxu0 0
    %639 = vmatpush.bf16.xpose.msra.mxu0 0
    %640 = vmatpush.bf16.xpose.msra.mxu0 0
    %641 = vmatpush.bf16.xpose.msra.mxu0 %v392
    %642 = vmatmul.bf16.gmra.mxu0 %v632
    %v643 = vpop.f32.mrf.mxu0
    %v644 = vadd.f32 %v318, %v643
    %v645 = vpop.f32.mrf.mxu0
    %646 = vdwg.mxu0
    %v648 = vsel %vm387, %v628, 0
    %650 = vmatpush.bf16.xpose.msra.mxu0 0
    %651 = vmatpush.bf16.xpose.msra.mxu0 0
    %652 = vmatpush.bf16.xpose.msra.mxu0 0
    %653 = vmatpush.bf16.xpose.msra.mxu0 0
    %654 = vmatpush.bf16.xpose.msra.mxu0 0
    %655 = vmatpush.bf16.xpose.msra.mxu0 0
    %656 = vmatpush.bf16.xpose.msra.mxu0 0
    %657 = vmatpush.bf16.xpose.msra.mxu0 %v416
    %658 = vmatmul.bf16.gmra.mxu0 %v648
    %v659 = vpop.f32.mrf.mxu0
    %v660 = vadd.f32 %v319, %v659
    %v661 = vpop.f32.mrf.mxu0
    %662 = vdwg.mxu0
    %v664 = vsel %vm387, %v629, 0
    %666 = vmatpush.bf16.xpose.msra.mxu0 0
    %667 = vmatpush.bf16.xpose.msra.mxu0 0
    %668 = vmatpush.bf16.xpose.msra.mxu0 0
    %669 = vmatpush.bf16.xpose.msra.mxu0 0
    %670 = vmatpush.bf16.xpose.msra.mxu0 0
    %671 = vmatpush.bf16.xpose.msra.mxu0 0
    %672 = vmatpush.bf16.xpose.msra.mxu0 0
    %673 = vmatpush.bf16.xpose.msra.mxu0 %v440
    %674 = vmatmul.bf16.gmra.mxu0 %v664
    %v675 = vpop.f32.mrf.mxu0
    %v676 = vadd.f32 %v320, %v675
    %v677 = vpop.f32.mrf.mxu0
    %678 = vdwg.mxu0
    %v680 = vsel %vm387, %v630, 0
    %682 = vmatpush.bf16.xpose.msra.mxu0 0
    %683 = vmatpush.bf16.xpose.msra.mxu0 0
    %684 = vmatpush.bf16.xpose.msra.mxu0 0
    %685 = vmatpush.bf16.xpose.msra.mxu0 0
    %686 = vmatpush.bf16.xpose.msra.mxu0 0
    %687 = vmatpush.bf16.xpose.msra.mxu0 0
    %688 = vmatpush.bf16.xpose.msra.mxu0 0
    %689 = vmatpush.bf16.xpose.msra.mxu0 %v464
    %690 = vmatmul.bf16.gmra.mxu0 %v680
    %v691 = vpop.f32.mrf.mxu0
    %v692 = vadd.f32 %v321, %v691
    %v693 = vpop.f32.mrf.mxu0
    %694 = vdwg.mxu0
    %v695 = vsel %vm479, %v644, -inf
    %696 = vmax.xlane.f32.xlu0 %v695
    %v697 = vpop.xlane.xlu0 %696
    %v698 = vsel %vm479, %v660, -inf
    %699 = vmax.xlane.f32.xlu0 %v698
    %v700 = vpop.xlane.xlu0 %699
    %v701 = vsel %vm479, %v676, -inf
    %702 = vmax.xlane.f32.xlu0 %v701
    %v703 = vpop.xlane.xlu0 %702
    %v704 = vsel %vm479, %v692, -inf
    %705 = vmax.xlane.f32.xlu0 %v704
    %v706 = vpop.xlane.xlu0 %705
    %v707 = vsub.f32 %v644, %v697
    %v708 = vsub.f32 %v660, %v700
    %v709 = vsub.f32 %v676, %v703
    %v710 = vsub.f32 %v692, %v706
    %v711 = vmul.f32 %v707, 1.442695
    %v712 = vpow.pop %v711
    %v713 = vmul.f32 %v708, 1.442695
    %v714 = vpow.pop %v713
    %v715 = vmul.f32 %v709, 1.442695
    %v716 = vpow.pop %v715
    %v717 = vmul.f32 %v710, 1.442695
    %v718 = vpow.pop %v717
    %v719 = vsel %vm479, %v712, 0.0
    %720 = vadd.xlane.f32.xlu0 %v719
    %v721 = vpop.xlane.xlu0 %720
    %v722 = vsel %vm479, %v714, 0.0
    %723 = vadd.xlane.f32.xlu0 %v722
    %v724 = vpop.xlane.xlu0 %723
    %v725 = vsel %vm479, %v716, 0.0
    %726 = vadd.xlane.f32.xlu0 %v725
    %v727 = vpop.xlane.xlu0 %726
    %v728 = vsel %vm479, %v718, 0.0
    %729 = vadd.xlane.f32.xlu0 %v728
    %v730 = vpop.xlane.xlu0 %729
    %v731 = vrcp.pop %v721
    %v732 = vmul.f32 %v721, %v731
    %v733 = vsub.f32 1.0, %v732
    %v734 = vmul.f32 %v731, %v733
    %v735 = vadd.f32 %v731, %v734
    %vm736 = vweird.f32 %v721
    %vm737 = vweird.f32 %v731
    %vm738 = vmor %vm736, %vm737
    %v739 = vsel %vm738, %v731, %v735
    %v740 = vand.u32 2147483647, %v721
    %vm741 = vcmp.eq.f32.partialorder %v740, 8.507059e+37
    %v742 = vand.u32 %v721, 2147483648
    %v743 = vor.u32 1.1754944e-38, %v742
    %v744 = vsel %vm741, %v743, %v739
    %v745 = vmul.f32 %v712, %v744
    %v746 = vrcp.pop %v724
    %v747 = vmul.f32 %v724, %v746
    %v748 = vsub.f32 1.0, %v747
    %v749 = vmul.f32 %v746, %v748
    %v750 = vadd.f32 %v746, %v749
    %vm751 = vweird.f32 %v724
    %vm752 = vweird.f32 %v746
    %vm753 = vmor %vm751, %vm752
    %v754 = vsel %vm753, %v746, %v750
    %v755 = vand.u32 2147483647, %v724
    %vm756 = vcmp.eq.f32.partialorder %v755, 8.507059e+37
    %v757 = vand.u32 %v724, 2147483648
    %v758 = vor.u32 1.1754944e-38, %v757
    %v759 = vsel %vm756, %v758, %v754
    %v760 = vmul.f32 %v714, %v759
    %v761 = vrcp.pop %v727
    %v762 = vmul.f32 %v727, %v761
    %v763 = vsub.f32 1.0, %v762
    %v764 = vmul.f32 %v761, %v763
    %v765 = vadd.f32 %v761, %v764
    %vm766 = vweird.f32 %v727
    %vm767 = vweird.f32 %v761
    %vm768 = vmor %vm766, %vm767
    %v769 = vsel %vm768, %v761, %v765
    %v770 = vand.u32 2147483647, %v727
    %vm771 = vcmp.eq.f32.partialorder %v770, 8.507059e+37
    %v772 = vand.u32 %v727, 2147483648
    %v773 = vor.u32 1.1754944e-38, %v772
    %v774 = vsel %vm771, %v773, %v769
    %v775 = vmul.f32 %v716, %v774
    %v776 = vrcp.pop %v730
    %v777 = vmul.f32 %v730, %v776
    %v778 = vsub.f32 1.0, %v777
    %v779 = vmul.f32 %v776, %v778
    %v780 = vadd.f32 %v776, %v779
    %vm781 = vweird.f32 %v730
    %vm782 = vweird.f32 %v776
    %vm783 = vmor %vm781, %vm782
    %v784 = vsel %vm783, %v776, %v780
    %v785 = vand.u32 2147483647, %v730
    %vm786 = vcmp.eq.f32.partialorder %v785, 8.507059e+37
    %v787 = vand.u32 %v730, 2147483648
    %v788 = vor.u32 1.1754944e-38, %v787
    %v789 = vsel %vm786, %v788, %v784
    %v790 = vmul.f32 %v718, %v789
    %v795 = vrot.slane %v760, 7
    %v796 = vsel %vm134, %v795, %v745
    %v797 = vrot.slane %v775, 6
    %v798 = vsel %vm137, %v797, %v796
    %v799 = vrot.slane %v790, 5
    %v800 = vsel %vm140, %v799, %v798
    %802 = vst.msk [vmem:[#allocation4] sm:$0xf] %vm587, %v800
    // Predicated region
    $region30: #{tpu_custom_call.1} parent=1 // pred_check
      _
    $region31: #{tpu_custom_call.1} parent=1 // pred_check_branch
      %804 = sbr.rel (0) target = $region33
    $region32: #{tpu_custom_call.1} parent=1 // pred_region
      %806 = vsyncadd [#allocation3], 0
      %s808 = sshll.u32 [#allocation2], 4
      %s809 = int_to_ptr.vmem [resolvable:$true] %s808
      %s810 = sshll.u32 %s7, 4
      %s811 = int_to_ptr.hbm [resolvable:$true] %s810
      %813 = dma.vmem_to_hbm [thread:$0]  %s809, 64, %s811, [#allocation3]
    $region33: #{tpu_custom_call.1} parent=1 // pred_fallthru
      _
    // Predicated region
    $region34: #{tpu_custom_call.1} parent=1 // pred_check
      _
    $region35: #{tpu_custom_call.1} parent=1 // pred_check_branch
      %815 = sbr.rel (0) target = $region37
    $region36: #{tpu_custom_call.1} parent=1 // pred_region
      %817 = vsyncadd [#allocation5], 0
      %s819 = sshll.u32 [#allocation4], 4
      %s820 = int_to_ptr.vmem [resolvable:$true] %s819
      %s821 = sshll.u32 %s8, 4
      %s822 = int_to_ptr.hbm [resolvable:$true] %s821
      %824 = dma.vmem_to_hbm [thread:$0]  %s820, 64, %s822, [#allocation5]
    $region37: #{tpu_custom_call.1} parent=1 // pred_fallthru
      _
    // Predicated region
    $region38: #{tpu_custom_call.1} parent=1 // pred_check
      _
    $region39: #{tpu_custom_call.1} parent=1 // pred_check_branch
      %826 = sbr.rel (0) target = $region41
    $region40: #{tpu_custom_call.1} parent=1 // pred_region
      %828 = dma.done [#allocation3], 64
    $region41: #{tpu_custom_call.1} parent=1 // pred_fallthru
      _
    // Predicated region
    $region42: #{tpu_custom_call.1} parent=1 // pred_check
      _
    $region43: #{tpu_custom_call.1} parent=1 // pred_check_branch
      %830 = sbr.rel (0) target = $region45
    $region44: #{tpu_custom_call.1} parent=1 // pred_region
      %832 = dma.done [#allocation5], 64
    $region45: #{tpu_custom_call.1} parent=1 // pred_fallthru
      _
    %833 = vsyncpa [#allocation3], 1
    %834 = vsyncpa [#allocation5], 1

</llo_original>
